<compile_context>
chip_gen: v7x
topology: tpu7x:2x2x1
jax: 0.10.0
libtpu: 0.0.40
codegen_flags: <defaults>
</compile_context>

<pallas_src>
import functools

import jax
import jax.numpy as jnp
from jax.experimental import pallas as pl
from jax.experimental.pallas import tpu as pltpu


def _round_up(x, m):
    return -(-x // m) * m


def _cdiv(a, b):
    return -(-a // b)


# ---------------------------------------------------------------------------
# Kernels
# ---------------------------------------------------------------------------

def _mlp_st(z, w1_ref, b1_ref, w2_ref, b2_ref, w3_ref, b3_ref, c_pad):
    """Conditioner MLP -> (s, t). bf16 matmul operands, f32 MXU accumulation.

    The coupling mask is already folded into w1, so z feeds the MXU directly.
    """
    zb = z.astype(jnp.bfloat16)
    h1 = jnp.dot(zb, w1_ref[...], preferred_element_type=jnp.float32) + b1_ref[...]
    h1 = jnp.maximum(h1, 0.0).astype(jnp.bfloat16)
    h2 = jnp.dot(h1, w2_ref[...], preferred_element_type=jnp.float32) + b2_ref[...]
    h2 = jnp.maximum(h2, 0.0).astype(jnp.bfloat16)
    st = jnp.dot(h2, w3_ref[...], preferred_element_type=jnp.float32) + b3_ref[...]
    s = jnp.tanh(st[:, :c_pad])          # 128-aligned static lane slices
    t = st[:, c_pad:]
    return s, t


def _coupling_fwd_kernel(c_pad,
                         z_ref, ldj_ref, mask_ref,
                         w1_ref, b1_ref, w2_ref, b2_ref, w3_ref, b3_ref,
                         y_ref, ldj_out_ref):
    z = z_ref[...]                        # (TB, Cp) f32
    mask = mask_ref[...]                  # (1, Cp)  f32
    s, t = _mlp_st(z, w1_ref, b1_ref, w2_ref, b2_ref, w3_ref, b3_ref, c_pad)
    om = 1.0 - mask
    y_ref[...] = (mask * z + om * (z * jnp.exp(s) + t)).astype(y_ref.dtype)
    ldj_out_ref[...] = (ldj_ref[...]
                        + jnp.sum(om * s, axis=1, keepdims=True)
                        ).astype(ldj_out_ref.dtype)


def _coupling_rev_kernel(c_pad,
                         z_ref, mask_ref,
                         w1_ref, b1_ref, w2_ref, b2_ref, w3_ref, b3_ref,
                         y_ref):
    z = z_ref[...]
    mask = mask_ref[...]
    s, t = _mlp_st(z, w1_ref, b1_ref, w2_ref, b2_ref, w3_ref, b3_ref, c_pad)
    om = 1.0 - mask
    y_ref[...] = (mask * z + om * (z - t) * jnp.exp(-s)).astype(y_ref.dtype)


# ---------------------------------------------------------------------------
# One-time parameter preparation (pad / cast / fold mask) — call ONCE and reuse
# ---------------------------------------------------------------------------

def prepare_params(params, mask):
    """Fold the coupling mask into w1, zero-pad all matmul dims to multiples of
    128, cast weights to bf16 and biases to f32.  Keeps the pad/cast XLA ops and
    their HBM traffic out of every coupling_apply call."""
    C = int(mask.shape[0])
    H = int(params["w1"].shape[1])
    Cp = _round_up(C, 128)
    Hp = _round_up(H, 128)

    f32, bf16 = jnp.float32, jnp.bfloat16
    mask_f = mask.astype(f32)

    # (mask * z) @ w1 == z @ (mask[:, None] * w1)  (mask is 0/1 -> exact)
    w1_eff = mask_f[:, None] * params["w1"].astype(f32)

    w1p = jnp.zeros((Cp, Hp), bf16).at[:C, :H].set(w1_eff.astype(bf16))
    b1p = jnp.zeros((1, Hp), f32).at[0, :H].set(params["b1"].astype(f32))
    w2p = jnp.zeros((Hp, Hp), bf16).at[:H, :H].set(params["w2"].astype(bf16))
    b2p = jnp.zeros((1, Hp), f32).at[0, :H].set(params["b2"].astype(f32))
    # Fused s/t head: s -> cols [0, Cp), t -> cols [Cp, 2*Cp).
    w3p = jnp.zeros((Hp, 2 * Cp), bf16)
    w3p = w3p.at[:H, :C].set(params["w3"][:, :C].astype(bf16))
    w3p = w3p.at[:H, Cp:Cp + C].set(params["w3"][:, C:].astype(bf16))
    b3p = jnp.zeros((1, 2 * Cp), f32)
    b3p = b3p.at[0, :C].set(params["b3"][:C].astype(f32))
    b3p = b3p.at[0, Cp:Cp + C].set(params["b3"][C:].astype(f32))

    # Padded feature columns get mask = 1 (identity branch): they contribute
    # exactly 0 to the y deltas and 0 to the ldj sum.
    mask_pad = jnp.ones((1, Cp), f32).at[0, :C].set(mask_f)

    return {"w1": w1p, "b1": b1p, "w2": w2p, "b2": b2p,
            "w3": w3p, "b3": b3p, "mask": mask_pad}


# ---------------------------------------------------------------------------
# Forward/reverse wrapper
# ---------------------------------------------------------------------------

@functools.partial(jax.jit, static_argnames=("reverse", "block_b"))
def coupling_apply(z, ldj, prepped, *, reverse=False, block_b=512):
    """Pallas implementation of Coupling.forward.

    z: (B, C) f32, ldj: (B,) f32, prepped: output of prepare_params().
    block_b: max batch tile.  512 is a good default on v6e/v7x; the actual
    tile is chosen to minimize padding and keep >= 2 grid steps (megacore).
    """
    B, C = z.shape
    Cp = prepped["mask"].shape[1]
    Hp = prepped["w1"].shape[1]

    # Batch tile: minimal padding, at least 2 grid steps when B > 8.
    n_steps = max(2, _cdiv(B, block_b)) if B > 8 else 1
    TB = _round_up(_cdiv(B, n_steps), 8)
    Bp = _round_up(B, TB)
    grid = (Bp // TB,)

    f32 = jnp.float32
    need_pad = (Bp != B) or (Cp != C)

    if need_pad:
        z_in = jnp.zeros((Bp, Cp), f32).at[:B, :C].set(z.astype(f32))
    else:
        z_in = z.astype(f32)

    batch_map = lambda i: (i, 0)
    const_map = lambda i: (0, 0)

    # Resident blocks: constant index_map + single buffer (no wasted VMEM).
    def wspec(shape):
        return pl.BlockSpec(shape, const_map,
                            pipeline_mode=pl.Buffered(buffer_count=1))

    weight_specs = [
        wspec((1, Cp)),           # mask
        wspec((Cp, Hp)),          # w1 (mask folded in)
        wspec((1, Hp)),           # b1
        wspec((Hp, Hp)),          # w2
        wspec((1, Hp)),           # b2
        wspec((Hp, 2 * Cp)),      # w3 (fused s/t heads)
        wspec((1, 2 * Cp)),       # b3
    ]
    weight_args = (prepped["mask"], prepped["w1"], prepped["b1"],
                   prepped["w2"], prepped["b2"], prepped["w3"], prepped["b3"])

    flops = 2 * Bp * (Cp * Hp + Hp * Hp + Hp * 2 * Cp)
    transcendentals = Bp * 2 * Cp
    weight_bytes = (Cp * Hp + Hp * Hp + Hp * 2 * Cp) * 2 + (2 * Hp + 3 * Cp + Cp) * 4

    # VMEM budget: double-buffered activation tiles + single-buffered weights
    # + per-tile intermediates; cap under v6e physical, leave v7x headroom.
    act_bytes = 2 * 2 * (TB * Cp * 4 + TB * 4)              # in + out, 2 bufs
    interm_bytes = TB * (2 * Hp + 2 * Cp) * 4
    vmem_limit = int(min(100 * 1024 * 1024,
                         max(32 * 1024 * 1024,
                             2 * (act_bytes + weight_bytes + interm_bytes))))

    cparams = pltpu.CompilerParams(
        dimension_semantics=("parallel",),    # batch grid shards across TCs
        vmem_limit_bytes=vmem_limit,
    )

    if not reverse:
        if need_pad:
            ldj_in = jnp.zeros((Bp, 1), f32).at[:B, 0].set(ldj.astype(f32))
        else:
            ldj_in = ldj.astype(f32).reshape(B, 1)

        y_out, ldj_out = pl.pallas_call(
            functools.partial(_coupling_fwd_kernel, Cp),
            out_shape=(jax.ShapeDtypeStruct((Bp, Cp), f32),
                       jax.ShapeDtypeStruct((Bp, 1), f32)),
            grid=grid,
            in_specs=[pl.BlockSpec((TB, Cp), batch_map),
                      pl.BlockSpec((TB, 1), batch_map)] + weight_specs,
            out_specs=(pl.BlockSpec((TB, Cp), batch_map),
                       pl.BlockSpec((TB, 1), batch_map)),
            # Only alias freshly-built padded temps; aliasing raw jit inputs
            # would force XLA to insert defensive copies.
            input_output_aliases=({0: 0, 1: 1} if need_pad else {}),
            compiler_params=cparams,
            cost_estimate=pl.CostEstimate(
                flops=flops, transcendentals=transcendentals,
                bytes_accessed=weight_bytes + (2 * Bp * Cp + 2 * Bp) * 4),
        )(z_in, ldj_in, *weight_args)

        if need_pad:
            return y_out[:B, :C], ldj_out[:B, 0]
        return y_out, ldj_out[:, 0]

    # Reverse: ldj is unchanged by the module -> don't stream it at all.
    y_out = pl.pallas_call(
        functools.partial(_coupling_rev_kernel, Cp),
        out_shape=jax.ShapeDtypeStruct((Bp, Cp), f32),
        grid=grid,
        in_specs=[pl.BlockSpec((TB, Cp), batch_map)] + weight_specs,
        out_specs=pl.BlockSpec((TB, Cp), batch_map),
        input_output_aliases=({0: 0} if need_pad else {}),
        compiler_params=cparams,
        cost_estimate=pl.CostEstimate(
            flops=flops, transcendentals=transcendentals,
            bytes_accessed=weight_bytes + 2 * Bp * Cp * 4),
    )(z_in, *weight_args)

    y = y_out[:B, :C] if need_pad else y_out
    return y, ldj


# ---------------------------------------------------------------------------
# Reference + test
# ---------------------------------------------------------------------------

def _reference(z, ldj, mask, params, reverse=False):
    """Plain-JAX f32 reference of the PyTorch forward."""
    zm = mask[None, :] * z
    h1 = jax.nn.relu(zm @ params["w1"] + params["b1"])
    h2 = jax.nn.relu(h1 @ params["w2"] + params["b2"])
    out = h2 @ params["w3"] + params["b3"]
    C = z.shape[1]
    s = jnp.tanh(out[:, :C])
    t = out[:, C:]
    m = mask[None, :]
    if not reverse:
        y = m * z + (1 - m) * (z * jnp.exp(s) + t)
        ldj = ldj + jnp.sum((1 - m) * s, axis=1)
    else:
        y = m * z + (1 - m) * (z - t) * jnp.exp(-s)
    return y, ldj


def make_params(key, c_in, n_hidden, scale=0.1):
    k1, k2, k3 = jax.random.split(key, 3)
    return {
        "w1": scale * jax.random.normal(k1, (c_in, n_hidden), jnp.float32),
        "b1": jnp.zeros((n_hidden,), jnp.float32),
        "w2": scale * jax.random.normal(k2, (n_hidden, n_hidden), jnp.float32),
        "b2": jnp.zeros((n_hidden,), jnp.float32),
        # Original __init__ zeroes this layer; use small random values so the
        # kernel's hot path is non-trivial.
        "w3": scale * jax.random.normal(k3, (n_hidden, 2 * c_in), jnp.float32),
        "b3": jnp.zeros((2 * c_in,), jnp.float32),
    }


if __name__ == "__main__":
    key = jax.random.PRNGKey(0)
    kz, kl, kp, kz2, kl2, kp2 = jax.random.split(key, 6)

    TOL = 2e-2  # bf16 matmul operands (f32 accumulation) vs f32 reference

    # ---- config 1: unaligned C / H -> exercises the padded path ----
    B, C, H = 32, 16, 64  # small synthetic sizes (module default n_hidden=1024)
    z = jax.random.normal(kz, (B, C), jnp.float32)
    ldj = jax.random.normal(kl, (B,), jnp.float32)
    mask = (jnp.arange(C) % 2).astype(jnp.float32)   # alternating checkerboard
    params = make_params(kp, C, H)
    prepped = prepare_params(params, mask)

    # block_b=8 forces a 4-step batch grid even at this toy size so the tiled,
    # pipelined, aliased path is actually exercised.
    y, ldj_out = coupling_apply(z, ldj, prepped, reverse=False, block_b=8)
    jax.block_until_ready((y, ldj_out))
    y_ref, ldj_ref = _reference(z, ldj, mask, params, reverse=False)
    assert jnp.allclose(y, y_ref, atol=TOL, rtol=TOL)
    assert jnp.allclose(ldj_out, ldj_ref, atol=TOL, rtol=TOL)

    y_r, ldj_r = coupling_apply(z, ldj, prepped, reverse=True, block_b=8)
    jax.block_until_ready((y_r, ldj_r))
    y_r_ref, ldj_r_ref = _reference(z, ldj, mask, params, reverse=True)
    assert jnp.allclose(y_r, y_r_ref, atol=TOL, rtol=TOL)
    assert jnp.allclose(ldj_r, ldj_r_ref, atol=TOL, rtol=TOL)

    # ---- config 2: lane-aligned C, tile-divisible B -> fast no-pad path ----
    B2, C2, H2 = 48, 128, 128
    z2 = jax.random.normal(kz2, (B2, C2), jnp.float32)
    ldj2 = jax.random.normal(kl2, (B2,), jnp.float32)
    mask2 = (jnp.arange(C2) % 2).astype(jnp.float32)
    params2 = make_params(kp2, C2, H2, scale=0.05)
    prepped2 = prepare_params(params2, mask2)

    y2, ldj2_out = coupling_apply(z2, ldj2, prepped2, reverse=False)
    jax.block_until_ready((y2, ldj2_out))
    y2_ref, ldj2_ref = _reference(z2, ldj2, mask2, params2, reverse=False)
    assert jnp.allclose(y2, y2_ref, atol=TOL, rtol=TOL)
    assert jnp.allclose(ldj2_out, ldj2_ref, atol=TOL, rtol=TOL)

    print("KERNEL_OK")
</pallas_src>

<mosaic_0001>
module attributes {stable_mosaic.version = 11 : i64} {
  func.func @_coupling_fwd_kernel(%arg0: i32, %arg1: memref<8x128xf32, #tpu.memory_space<vmem>>, %arg2: memref<8x1xf32, #tpu.memory_space<vmem>>, %arg3: memref<1x128xf32, #tpu.memory_space<vmem>>, %arg4: memref<128x128xbf16, #tpu.memory_space<vmem>>, %arg5: memref<1x128xf32, #tpu.memory_space<vmem>>, %arg6: memref<128x128xbf16, #tpu.memory_space<vmem>>, %arg7: memref<1x128xf32, #tpu.memory_space<vmem>>, %arg8: memref<128x256xbf16, #tpu.memory_space<vmem>>, %arg9: memref<1x256xf32, #tpu.memory_space<vmem>>, %arg10: memref<8x128xf32, #tpu.memory_space<vmem>>, %arg11: memref<8x1xf32, #tpu.memory_space<vmem>>) attributes {dimension_semantics = [#tpu.dimension_semantics<parallel>], iteration_bounds = array<i64: 4>, scalar_prefetch = 0 : i64, scratch_operands = 0 : i64, tpu.core_type = #tpu.core_type<tc>, window_params = [{transform_indices = @transform_0, window_bounds = array<i64: 8, 128>}, {transform_indices = @transform_1, window_bounds = array<i64: 8, 1>}, {pipeline_mode = #tpu.pipeline_mode<synchronous>, transform_indices = @transform_2, window_bounds = array<i64: 1, 128>}, {pipeline_mode = #tpu.pipeline_mode<synchronous>, transform_indices = @transform_3, window_bounds = array<i64: 128, 128>}, {pipeline_mode = #tpu.pipeline_mode<synchronous>, transform_indices = @transform_4, window_bounds = array<i64: 1, 128>}, {pipeline_mode = #tpu.pipeline_mode<synchronous>, transform_indices = @transform_5, window_bounds = array<i64: 128, 128>}, {pipeline_mode = #tpu.pipeline_mode<synchronous>, transform_indices = @transform_6, window_bounds = array<i64: 1, 128>}, {pipeline_mode = #tpu.pipeline_mode<synchronous>, transform_indices = @transform_7, window_bounds = array<i64: 128, 256>}, {pipeline_mode = #tpu.pipeline_mode<synchronous>, transform_indices = @transform_8, window_bounds = array<i64: 1, 256>}, {transform_indices = @transform_9, window_bounds = array<i64: 8, 128>}, {transform_indices = @transform_10, window_bounds = array<i64: 8, 1>}]} {
    %c0 = arith.constant 0 : index
    %c0_0 = arith.constant 0 : index
    %0 = vector.load %arg1[%c0, %c0_0] : memref<8x128xf32, #tpu.memory_space<vmem>>, vector<8x128xf32>
    %c0_1 = arith.constant 0 : index
    %c0_2 = arith.constant 0 : index
    %1 = vector.load %arg3[%c0_1, %c0_2] : memref<1x128xf32, #tpu.memory_space<vmem>>, vector<1x128xf32>
    %2 = arith.truncf %0 : vector<8x128xf32> to vector<8x128xbf16>
    %c0_3 = arith.constant 0 : index
    %c0_4 = arith.constant 0 : index
    %3 = vector.load %arg4[%c0_3, %c0_4] : memref<128x128xbf16, #tpu.memory_space<vmem>>, vector<128x128xbf16>
    %cst = arith.constant dense<0.000000e+00> : vector<8x128xf32>
    %4 = tpu.matmul %2, %3, %cst {dimension_numbers = #tpu.dot_dimension_numbers<[1], [0], [0], [1], [0, 0, 1, 1], [], []>} : vector<8x128xbf16>, vector<128x128xbf16>, vector<8x128xf32> -> vector<8x128xf32>
    %c0_5 = arith.constant 0 : index
    %c0_6 = arith.constant 0 : index
    %5 = vector.load %arg5[%c0_5, %c0_6] : memref<1x128xf32, #tpu.memory_space<vmem>>, vector<1x128xf32>
    %6 = vector.broadcast %5 : vector<1x128xf32> to vector<8x128xf32>
    %7 = arith.addf %4, %6 : vector<8x128xf32>
    %cst_7 = arith.constant 0.000000e+00 : f32
    %8 = vector.broadcast %cst_7 : f32 to vector<8x128xf32>
    %9 = arith.maximumf %7, %8 : vector<8x128xf32>
    %10 = arith.truncf %9 : vector<8x128xf32> to vector<8x128xbf16>
    %c0_8 = arith.constant 0 : index
    %c0_9 = arith.constant 0 : index
    %11 = vector.load %arg6[%c0_8, %c0_9] : memref<128x128xbf16, #tpu.memory_space<vmem>>, vector<128x128xbf16>
    %cst_10 = arith.constant dense<0.000000e+00> : vector<8x128xf32>
    %12 = tpu.matmul %10, %11, %cst_10 {dimension_numbers = #tpu.dot_dimension_numbers<[1], [0], [0], [1], [0, 0, 1, 1], [], []>} : vector<8x128xbf16>, vector<128x128xbf16>, vector<8x128xf32> -> vector<8x128xf32>
    %c0_11 = arith.constant 0 : index
    %c0_12 = arith.constant 0 : index
    %13 = vector.load %arg7[%c0_11, %c0_12] : memref<1x128xf32, #tpu.memory_space<vmem>>, vector<1x128xf32>
    %14 = vector.broadcast %13 : vector<1x128xf32> to vector<8x128xf32>
    %15 = arith.addf %12, %14 : vector<8x128xf32>
    %cst_13 = arith.constant 0.000000e+00 : f32
    %16 = vector.broadcast %cst_13 : f32 to vector<8x128xf32>
    %17 = arith.maximumf %15, %16 : vector<8x128xf32>
    %18 = arith.truncf %17 : vector<8x128xf32> to vector<8x128xbf16>
    %c0_14 = arith.constant 0 : index
    %c0_15 = arith.constant 0 : index
    %19 = vector.load %arg8[%c0_14, %c0_15] : memref<128x256xbf16, #tpu.memory_space<vmem>>, vector<128x256xbf16>
    %cst_16 = arith.constant dense<0.000000e+00> : vector<8x256xf32>
    %20 = tpu.matmul %18, %19, %cst_16 {dimension_numbers = #tpu.dot_dimension_numbers<[1], [0], [0], [1], [0, 0, 1, 1], [], []>} : vector<8x128xbf16>, vector<128x256xbf16>, vector<8x256xf32> -> vector<8x256xf32>
    %c0_17 = arith.constant 0 : index
    %c0_18 = arith.constant 0 : index
    %21 = vector.load %arg9[%c0_17, %c0_18] : memref<1x256xf32, #tpu.memory_space<vmem>>, vector<1x256xf32>
    %22 = vector.broadcast %21 : vector<1x256xf32> to vector<8x256xf32>
    %23 = arith.addf %20, %22 : vector<8x256xf32>
    %24 = vector.extract_strided_slice %23 {offsets = [0, 0], sizes = [8, 128], strides = [1, 1]} : vector<8x256xf32> to vector<8x128xf32>
    %25 = math.tanh %24 : vector<8x128xf32>
    %26 = vector.extract_strided_slice %23 {offsets = [0, 128], sizes = [8, 128], strides = [1, 1]} : vector<8x256xf32> to vector<8x128xf32>
    %cst_19 = arith.constant 1.000000e+00 : f32
    %27 = vector.broadcast %cst_19 : f32 to vector<1x128xf32>
    %28 = arith.subf %27, %1 : vector<1x128xf32>
    %29 = vector.broadcast %1 : vector<1x128xf32> to vector<8x128xf32>
    %30 = arith.mulf %29, %0 : vector<8x128xf32>
    %31 = math.exp %25 : vector<8x128xf32>
    %32 = arith.mulf %0, %31 : vector<8x128xf32>
    %33 = arith.addf %32, %26 : vector<8x128xf32>
    %34 = vector.broadcast %28 : vector<1x128xf32> to vector<8x128xf32>
    %35 = arith.mulf %34, %33 : vector<8x128xf32>
    %36 = arith.addf %30, %35 : vector<8x128xf32>
    %c0_20 = arith.constant 0 : index
    %c0_21 = arith.constant 0 : index
    %37 = vector.load %arg10[%c0_20, %c0_21] : memref<8x128xf32, #tpu.memory_space<vmem>>, vector<8x128xf32>
    tpu.vector_store %arg10[%c0_20, %c0_21], %36 {strides = array<i32>} : memref<8x128xf32, #tpu.memory_space<vmem>>, vector<8x128xf32>,
    %c0_22 = arith.constant 0 : index
    %c0_23 = arith.constant 0 : index
    %38 = vector.load %arg2[%c0_22, %c0_23] : memref<8x1xf32, #tpu.memory_space<vmem>>, vector<8x1xf32>
    %39 = vector.broadcast %28 : vector<1x128xf32> to vector<8x128xf32>
    %40 = arith.mulf %39, %25 : vector<8x128xf32>
    %cst_24 = arith.constant dense<0.000000e+00> : vector<8xf32>
    %41 = vector.multi_reduction <add>, %40, %cst_24 [1] : vector<8x128xf32> to vector<8xf32>
    %42 = vector.shape_cast %41 : vector<8xf32> to vector<8x1xf32>
    %43 = arith.addf %38, %42 : vector<8x1xf32>
    %c0_25 = arith.constant 0 : index
    %c0_26 = arith.constant 0 : index
    %44 = vector.load %arg11[%c0_25, %c0_26] : memref<8x1xf32, #tpu.memory_space<vmem>>, vector<8x1xf32>
    tpu.vector_store %arg11[%c0_25, %c0_26], %43 {strides = array<i32>} : memref<8x1xf32, #tpu.memory_space<vmem>>, vector<8x1xf32>,
    return
  }
  func.func @transform_0(%arg0: i32) -> (i32, i32) {
    %c0_i32 = arith.constant 0 : i32
    %c0_i32_0 = arith.constant 0 : i32
    return %arg0, %c0_i32 : i32, i32
  }
  func.func @transform_1(%arg0: i32) -> (i32, i32) {
    %c0_i32 = arith.constant 0 : i32
    %c0_i32_0 = arith.constant 0 : i32
    return %arg0, %c0_i32 : i32, i32
  }
  func.func @transform_2(%arg0: i32) -> (i32, i32) {
    %c0_i32 = arith.constant 0 : i32
    %c0_i32_0 = arith.constant 0 : i32
    %c0_i32_1 = arith.constant 0 : i32
    return %c0_i32, %c0_i32_0 : i32, i32
  }
  func.func @transform_3(%arg0: i32) -> (i32, i32) {
    %c0_i32 = arith.constant 0 : i32
    %c0_i32_0 = arith.constant 0 : i32
    %c0_i32_1 = arith.constant 0 : i32
    return %c0_i32, %c0_i32_0 : i32, i32
  }
  func.func @transform_4(%arg0: i32) -> (i32, i32) {
    %c0_i32 = arith.constant 0 : i32
    %c0_i32_0 = arith.constant 0 : i32
    %c0_i32_1 = arith.constant 0 : i32
    return %c0_i32, %c0_i32_0 : i32, i32
  }
  func.func @transform_5(%arg0: i32) -> (i32, i32) {
    %c0_i32 = arith.constant 0 : i32
    %c0_i32_0 = arith.constant 0 : i32
    %c0_i32_1 = arith.constant 0 : i32
    return %c0_i32, %c0_i32_0 : i32, i32
  }
  func.func @transform_6(%arg0: i32) -> (i32, i32) {
    %c0_i32 = arith.constant 0 : i32
    %c0_i32_0 = arith.constant 0 : i32
    %c0_i32_1 = arith.constant 0 : i32
    return %c0_i32, %c0_i32_0 : i32, i32
  }
  func.func @transform_7(%arg0: i32) -> (i32, i32) {
    %c0_i32 = arith.constant 0 : i32
    %c0_i32_0 = arith.constant 0 : i32
    %c0_i32_1 = arith.constant 0 : i32
    return %c0_i32, %c0_i32_0 : i32, i32
  }
  func.func @transform_8(%arg0: i32) -> (i32, i32) {
    %c0_i32 = arith.constant 0 : i32
    %c0_i32_0 = arith.constant 0 : i32
    %c0_i32_1 = arith.constant 0 : i32
    return %c0_i32, %c0_i32_0 : i32, i32
  }
  func.func @transform_9(%arg0: i32) -> (i32, i32) {
    %c0_i32 = arith.constant 0 : i32
    %c0_i32_0 = arith.constant 0 : i32
    return %arg0, %c0_i32 : i32, i32
  }
  func.func @transform_10(%arg0: i32) -> (i32, i32) {
    %c0_i32 = arith.constant 0 : i32
    %c0_i32_0 = arith.constant 0 : i32
    return %arg0, %c0_i32 : i32, i32
  }
}

</mosaic_0001>

<llo_original>
// kernel: coupling_apply.1
$region0: #{coupling_apply.1}
  #allocation0 [shape = 'u32[]', space=smem, size = 0x4, offset = 0x4, fixed_abs, tag = 'smem constant byte address 0x4 - core index']
  #allocation1 [shape = 'u32[144,128]{1,0:T(1,128)}', space=vmem, size = 0x12000, scoped, tag = 'internal scratch']
  %s0 = inlined_call_operand.vmem [shape: f32[32,128], index: 0, kind: input, shape index: {}, may-alias: {0,9}]
  %s1 = inlined_call_operand.vmem [shape: f32[32,1], index: 1, kind: input, shape index: {}, may-alias: {1,10}]
  %s2 = inlined_call_operand.vmem [shape: f32[1,128], index: 2, kind: input, shape index: {}]
  %s3 = inlined_call_operand.vmem [shape: bf16[128,128], index: 3, kind: input, shape index: {}]
  %s4 = inlined_call_operand.vmem [shape: f32[1,128], index: 4, kind: input, shape index: {}]
  %s5 = inlined_call_operand.hbm [shape: bf16[128,128], index: 5, kind: input, shape index: {}]
  %s6 = inlined_call_operand.vmem [shape: f32[1,128], index: 6, kind: input, shape index: {}]
  %s7 = inlined_call_operand.vmem [shape: bf16[128,256], index: 7, kind: input, shape index: {}]
  %s8 = inlined_call_operand.vmem [shape: f32[1,256], index: 8, kind: input, shape index: {}]
  %s9 = inlined_call_operand.vmem [shape: f32[32,128], index: 9, kind: output, shape index: {0}, may-alias: {0,9}]
  %s10 = inlined_call_operand.vmem [shape: f32[32,1], index: 10, kind: output, shape index: {1}, may-alias: {1,10}]
  %11 = xla_tuple %s9, %s10
  %s12 = sld [smem:[#allocation0]]
  $region81: #{coupling_apply.1} parent=0
    _
  %s14 = ssub.s32 1, %s12
  %s15 = scalar_select 0, %s14, %s12
  $region1: #{coupling_apply.1} parent=0
    #allocation2 [shape = 'u8[32768]{0}', space=vmem, size = 0x8000, scoped, tag = 'input window, operand 5, single buffered']
    #allocation3 [shape = 's32[2]{0}', space=sflag, size = 0x8, scoped, tag = 'scoped memory for coupling_apply.1']
    %16 = vsyncpa [#allocation3], 0
    loop: start=0, step=1, limit=6
    $region2: #{coupling_apply.1} parent=1 // loop_pre_header
      _
    $region3: #{coupling_apply.1} parent=1 // loop_header
      %s18 = sphi 0, %s22
      %p19 = scmp.ge.s32.totalorder %s18, 6
      %s28 = sphi 0, %s30
      %s31 = sphi 0, %s28
      %s32 = sphi 0, %s31
      %s48 = sphi 0, %s32
      %s54 = sphi 0, %s56
      %s57 = sphi 0, %s54
      %s58 = sphi 0, %s57
      %s74 = sphi 0, %s58
      %s78 = sphi 0, %s78
      %s80 = sphi 0, %s78
      %s81 = sphi 0, %s80
      %s95 = sphi 0, %s81
      %s99 = sphi 0, %s99
      %s101 = sphi 0, %s99
      %s102 = sphi 0, %s101
      %s116 = sphi 0, %s102
      %s120 = sphi 0, %s120
      %s122 = sphi 0, %s120
      %s123 = sphi 0, %s122
      %s137 = sphi 0, %s123
      %s141 = sphi 0, %s141
      %s143 = sphi 0, %s141
      %s144 = sphi 0, %s143
      %s158 = sphi 0, %s144
      %s162 = sphi 0, %s162
      %s164 = sphi 0, %s162
      %s165 = sphi 0, %s164
      %s179 = sphi 0, %s165
      %s183 = sphi 0, %s183
      %s185 = sphi 0, %s183
      %s186 = sphi 0, %s185
      %s200 = sphi 0, %s186
      %s204 = sphi 0, %s204
      %s206 = sphi 0, %s204
      %s207 = sphi 0, %s206
      %s221 = sphi 0, %s207
      %s227 = sphi 0, %s229
      %s230 = sphi 0, %s227
      %s231 = sphi 0, %s230
      %s247 = sphi 0, %s231
      %s253 = sphi 0, %s255
      %s256 = sphi 0, %s253
      %s257 = sphi 0, %s256
      %s273 = sphi 0, %s257
    $region4: #{coupling_apply.1} parent=1 // loop_header_branch
      %21 = sbr.rel (%p19) target = $region8
    $region5: #{coupling_apply.1} parent=1 // loop_body
      %s23 = ssub.s32 %s18, 1
      %s24 = ssub.s32 %s18, 2
      %s25 = sadd.s32 %s18, 1
      %s26 = ssub.s32 %s18, %s25
      %p27 = scmp.eq.s32.totalorder %s26, 0
      %s29 = sadd.s32 %s28, 1
      %s30 = scalar_select %p27, %s28, %s29
      %p33 = pneg %p27
      %p34 = scmp.eq.s32.totalorder %s18, 3
      %p35 = por %p33, %p34
      %p36 = scmp.ne.s32.totalorder %s28, %s31
      %p37 = scmp.eq.s32.totalorder %s18, 0
      %p38 = por %p36, %p37
      %p39 = scmp.ne.s32.totalorder %s28, %s31
      %p40 = scmp.eq.s32.totalorder %s23, 3
      %p41 = por %p39, %p40
      %p42 = scmp.ne.s32.totalorder %s31, %s32
      %p43 = scmp.eq.s32.totalorder %s23, 0
      %p44 = por %p42, %p43
      %p45 = scmp.ne.s32.totalorder %s31, %s32
      %p46 = scmp.eq.s32.totalorder %s24, 3
      %p47 = por %p45, %p46
      %p49 = scmp.ne.s32.totalorder %s32, %s48
      %p50 = scmp.eq.s32.totalorder %s24, 0
      %p51 = por %p49, %p50
      %s52 = ssub.s32 %s18, %s25
      %p53 = scmp.eq.s32.totalorder %s52, 0
      %s55 = sadd.s32 %s54, 1
      %s56 = scalar_select %p53, %s54, %s55
      %p59 = pneg %p53
      %p60 = scmp.eq.s32.totalorder %s18, 3
      %p61 = por %p59, %p60
      %p62 = scmp.ne.s32.totalorder %s54, %s57
      %p63 = scmp.eq.s32.totalorder %s18, 0
      %p64 = por %p62, %p63
      %p65 = scmp.ne.s32.totalorder %s54, %s57
      %p66 = scmp.eq.s32.totalorder %s23, 3
      %p67 = por %p65, %p66
      %p68 = scmp.ne.s32.totalorder %s57, %s58
      %p69 = scmp.eq.s32.totalorder %s23, 0
      %p70 = por %p68, %p69
      %p71 = scmp.ne.s32.totalorder %s57, %s58
      %p72 = scmp.eq.s32.totalorder %s24, 3
      %p73 = por %p71, %p72
      %p75 = scmp.ne.s32.totalorder %s58, %s74
      %p76 = scmp.eq.s32.totalorder %s24, 0
      %p77 = por %p75, %p76
      %s79 = sadd.s32 %s78, 1
      %p82 = scmp.eq.s32.totalorder %s18, 3
      %p83 = scmp.ne.s32.totalorder %s78, %s80
      %p84 = scmp.eq.s32.totalorder %s18, 0
      %p85 = por %p83, %p84
      %p86 = scmp.ne.s32.totalorder %s78, %s80
      %p87 = scmp.eq.s32.totalorder %s23, 3
      %p88 = por %p86, %p87
      %p89 = scmp.ne.s32.totalorder %s80, %s81
      %p90 = scmp.eq.s32.totalorder %s23, 0
      %p91 = por %p89, %p90
      %p92 = scmp.ne.s32.totalorder %s80, %s81
      %p93 = scmp.eq.s32.totalorder %s24, 3
      %p94 = por %p92, %p93
      %p96 = scmp.ne.s32.totalorder %s81, %s95
      %p97 = scmp.eq.s32.totalorder %s24, 0
      %p98 = por %p96, %p97
      %s100 = sadd.s32 %s99, 1
      %p103 = scmp.eq.s32.totalorder %s18, 3
      %p104 = scmp.ne.s32.totalorder %s99, %s101
      %p105 = scmp.eq.s32.totalorder %s18, 0
      %p106 = por %p104, %p105
      %p107 = scmp.ne.s32.totalorder %s99, %s101
      %p108 = scmp.eq.s32.totalorder %s23, 3
      %p109 = por %p107, %p108
      %p110 = scmp.ne.s32.totalorder %s101, %s102
      %p111 = scmp.eq.s32.totalorder %s23, 0
      %p112 = por %p110, %p111
      %p113 = scmp.ne.s32.totalorder %s101, %s102
      %p114 = scmp.eq.s32.totalorder %s24, 3
      %p115 = por %p113, %p114
      %p117 = scmp.ne.s32.totalorder %s102, %s116
      %p118 = scmp.eq.s32.totalorder %s24, 0
      %p119 = por %p117, %p118
      %s121 = sadd.s32 %s120, 1
      %p124 = scmp.eq.s32.totalorder %s18, 3
      %p125 = scmp.ne.s32.totalorder %s120, %s122
      %p126 = scmp.eq.s32.totalorder %s18, 0
      %p127 = por %p125, %p126
      %p128 = scmp.ne.s32.totalorder %s120, %s122
      %p129 = scmp.eq.s32.totalorder %s23, 3
      %p130 = por %p128, %p129
      %p131 = scmp.ne.s32.totalorder %s122, %s123
      %p132 = scmp.eq.s32.totalorder %s23, 0
      %p133 = por %p131, %p132
      %p134 = scmp.ne.s32.totalorder %s122, %s123
      %p135 = scmp.eq.s32.totalorder %s24, 3
      %p136 = por %p134, %p135
      %p138 = scmp.ne.s32.totalorder %s123, %s137
      %p139 = scmp.eq.s32.totalorder %s24, 0
      %p140 = por %p138, %p139
      %s142 = sadd.s32 %s141, 1
      %p145 = scmp.eq.s32.totalorder %s18, 3
      %p146 = scmp.ne.s32.totalorder %s141, %s143
      %p147 = scmp.eq.s32.totalorder %s18, 0
      %p148 = por %p146, %p147
      %p149 = scmp.ne.s32.totalorder %s141, %s143
      %p150 = scmp.eq.s32.totalorder %s23, 3
      %p151 = por %p149, %p150
      %p152 = scmp.ne.s32.totalorder %s143, %s144
      %p153 = scmp.eq.s32.totalorder %s23, 0
      %p154 = por %p152, %p153
      %p155 = scmp.ne.s32.totalorder %s143, %s144
      %p156 = scmp.eq.s32.totalorder %s24, 3
      %p157 = por %p155, %p156
      %p159 = scmp.ne.s32.totalorder %s144, %s158
      %p160 = scmp.eq.s32.totalorder %s24, 0
      %p161 = por %p159, %p160
      %s163 = sadd.s32 %s162, 1
      %p166 = scmp.eq.s32.totalorder %s18, 3
      %p167 = scmp.ne.s32.totalorder %s162, %s164
      %p168 = scmp.eq.s32.totalorder %s18, 0
      %p169 = por %p167, %p168
      %p170 = scmp.ne.s32.totalorder %s162, %s164
      %p171 = scmp.eq.s32.totalorder %s23, 3
      %p172 = por %p170, %p171
      %p173 = scmp.ne.s32.totalorder %s164, %s165
      %p174 = scmp.eq.s32.totalorder %s23, 0
      %p175 = por %p173, %p174
      %p176 = scmp.ne.s32.totalorder %s164, %s165
      %p177 = scmp.eq.s32.totalorder %s24, 3
      %p178 = por %p176, %p177
      %p180 = scmp.ne.s32.totalorder %s165, %s179
      %p181 = scmp.eq.s32.totalorder %s24, 0
      %p182 = por %p180, %p181
      %s184 = sadd.s32 %s183, 1
      %p187 = scmp.eq.s32.totalorder %s18, 3
      %p188 = scmp.ne.s32.totalorder %s183, %s185
      %p189 = scmp.eq.s32.totalorder %s18, 0
      %p190 = por %p188, %p189
      %p191 = scmp.ne.s32.totalorder %s183, %s185
      %p192 = scmp.eq.s32.totalorder %s23, 3
      %p193 = por %p191, %p192
      %p194 = scmp.ne.s32.totalorder %s185, %s186
      %p195 = scmp.eq.s32.totalorder %s23, 0
      %p196 = por %p194, %p195
      %p197 = scmp.ne.s32.totalorder %s185, %s186
      %p198 = scmp.eq.s32.totalorder %s24, 3
      %p199 = por %p197, %p198
      %p201 = scmp.ne.s32.totalorder %s186, %s200
      %p202 = scmp.eq.s32.totalorder %s24, 0
      %p203 = por %p201, %p202
      %s205 = sadd.s32 %s204, 1
      %p208 = scmp.eq.s32.totalorder %s18, 3
      %p209 = scmp.ne.s32.totalorder %s204, %s206
      %p210 = scmp.eq.s32.totalorder %s18, 0
      %p211 = por %p209, %p210
      %p212 = scmp.ne.s32.totalorder %s204, %s206
      %p213 = scmp.eq.s32.totalorder %s23, 3
      %p214 = por %p212, %p213
      %p215 = scmp.ne.s32.totalorder %s206, %s207
      %p216 = scmp.eq.s32.totalorder %s23, 0
      %p217 = por %p215, %p216
      %p218 = scmp.ne.s32.totalorder %s206, %s207
      %p219 = scmp.eq.s32.totalorder %s24, 3
      %p220 = por %p218, %p219
      %p222 = scmp.ne.s32.totalorder %s207, %s221
      %p223 = scmp.eq.s32.totalorder %s24, 0
      %p224 = por %p222, %p223
      %s225 = ssub.s32 %s18, %s25
      %p226 = scmp.eq.s32.totalorder %s225, 0
      %s228 = sadd.s32 %s227, 1
      %s229 = scalar_select %p226, %s227, %s228
      %p232 = pneg %p226
      %p233 = scmp.eq.s32.totalorder %s18, 3
      %p234 = por %p232, %p233
      %p235 = scmp.ne.s32.totalorder %s227, %s230
      %p236 = scmp.eq.s32.totalorder %s18, 0
      %p237 = por %p235, %p236
      %p238 = scmp.ne.s32.totalorder %s227, %s230
      %p239 = scmp.eq.s32.totalorder %s23, 3
      %p240 = por %p238, %p239
      %p241 = scmp.ne.s32.totalorder %s230, %s231
      %p242 = scmp.eq.s32.totalorder %s23, 0
      %p243 = por %p241, %p242
      %p244 = scmp.ne.s32.totalorder %s230, %s231
      %p245 = scmp.eq.s32.totalorder %s24, 3
      %p246 = por %p244, %p245
      %p248 = scmp.ne.s32.totalorder %s231, %s247
      %p249 = scmp.eq.s32.totalorder %s24, 0
      %p250 = por %p248, %p249
      %s251 = ssub.s32 %s18, %s25
      %p252 = scmp.eq.s32.totalorder %s251, 0
      %s254 = sadd.s32 %s253, 1
      %s255 = scalar_select %p252, %s253, %s254
      %p258 = pneg %p252
      %p259 = scmp.eq.s32.totalorder %s18, 3
      %p260 = por %p258, %p259
      %p261 = scmp.ne.s32.totalorder %s253, %s256
      %p262 = scmp.eq.s32.totalorder %s18, 0
      %p263 = por %p261, %p262
      %p264 = scmp.ne.s32.totalorder %s253, %s256
      %p265 = scmp.eq.s32.totalorder %s23, 3
      %p266 = por %p264, %p265
      %p267 = scmp.ne.s32.totalorder %s256, %s257
      %p268 = scmp.eq.s32.totalorder %s23, 0
      %p269 = por %p267, %p268
      %p270 = scmp.ne.s32.totalorder %s256, %s257
      %p271 = scmp.eq.s32.totalorder %s24, 3
      %p272 = por %p270, %p271
      %p274 = scmp.ne.s32.totalorder %s257, %s273
      %p275 = scmp.eq.s32.totalorder %s24, 0
      %p276 = por %p274, %p275
      %p277 = scmp.le.s32.totalorder 1, %s18
      %p278 = scmp.lt.s32.totalorder %s18, 5
      %p279 = pnand %p277, %p278
      %p280 = pneg %p279
      // Predicated region
      $region9: #{coupling_apply.1} parent=5 // pred_check
        _
      $region10: #{coupling_apply.1} parent=5 // pred_check_branch
        %282 = sbr.rel (%p279) target = $region12
      $region11: #{coupling_apply.1} parent=5 // pred_region
        %s283 = ssub.s32 %s18, 1
        // Predicated region
        $region13: #{coupling_apply.1} parent=11 // pred_check
          %p284 = pneg %p91
        $region14: #{coupling_apply.1} parent=11 // pred_check_branch
          %286 = sbr.rel (%p284) target = $region16
        $region15: #{coupling_apply.1} parent=11 // pred_region
          _
        $region16: #{coupling_apply.1} parent=11 // pred_fallthru
          _
        // Predicated region
        $region17: #{coupling_apply.1} parent=11 // pred_check
          %p287 = pneg %p112
        $region18: #{coupling_apply.1} parent=11 // pred_check_branch
          %289 = sbr.rel (%p287) target = $region20
        $region19: #{coupling_apply.1} parent=11 // pred_region
          _
        $region20: #{coupling_apply.1} parent=11 // pred_fallthru
          _
        // Predicated region
        $region21: #{coupling_apply.1} parent=11 // pred_check
          %p290 = pneg %p133
        $region22: #{coupling_apply.1} parent=11 // pred_check_branch
          %292 = sbr.rel (%p290) target = $region24
        $region23: #{coupling_apply.1} parent=11 // pred_region
          _
        $region24: #{coupling_apply.1} parent=11 // pred_fallthru
          _
        // Predicated region
        $region25: #{coupling_apply.1} parent=11 // pred_check
          %p293 = pneg %p154
        $region26: #{coupling_apply.1} parent=11 // pred_check_branch
          %295 = sbr.rel (%p293) target = $region28
        $region27: #{coupling_apply.1} parent=11 // pred_region
          %s297 = ssub.s32 1024, 1024
          %298 = vsyncadd [#allocation3], %s297
          %s299 = sshll.u32 [#allocation2], 4
          %s300 = int_to_ptr.vmem [resolvable:$true] %s299
          %305 = dma.hbm_to_vmem [thread:$0]  %s5, 1024, %s300, [#allocation3], 64, 64, 4
        $region28: #{coupling_apply.1} parent=11 // pred_fallthru
          _
        // Predicated region
        $region29: #{coupling_apply.1} parent=11 // pred_check
          %p306 = pneg %p175
        $region30: #{coupling_apply.1} parent=11 // pred_check_branch
          %308 = sbr.rel (%p306) target = $region32
        $region31: #{coupling_apply.1} parent=11 // pred_region
          _
        $region32: #{coupling_apply.1} parent=11 // pred_fallthru
          _
        // Predicated region
        $region33: #{coupling_apply.1} parent=11 // pred_check
          %p309 = pneg %p196
        $region34: #{coupling_apply.1} parent=11 // pred_check_branch
          %311 = sbr.rel (%p309) target = $region36
        $region35: #{coupling_apply.1} parent=11 // pred_region
          _
        $region36: #{coupling_apply.1} parent=11 // pred_fallthru
          _
        // Predicated region
        $region37: #{coupling_apply.1} parent=11 // pred_check
          %p312 = pneg %p217
        $region38: #{coupling_apply.1} parent=11 // pred_check_branch
          %314 = sbr.rel (%p312) target = $region40
        $region39: #{coupling_apply.1} parent=11 // pred_region
          _
        $region40: #{coupling_apply.1} parent=11 // pred_fallthru
          _
      $region12: #{coupling_apply.1} parent=5 // pred_fallthru
        _
      %p315 = scmp.lt.s32.totalorder %s18, 4
      // Predicated region
      $region41: #{coupling_apply.1} parent=5 // pred_check
        %p316 = pneg %p315
      $region42: #{coupling_apply.1} parent=5 // pred_check_branch
        %318 = sbr.rel (%p316) target = $region44
      $region43: #{coupling_apply.1} parent=5 // pred_region
        // Predicated region
        $region45: #{coupling_apply.1} parent=43 // pred_check
          %p319 = pneg %p38
        $region46: #{coupling_apply.1} parent=43 // pred_check_branch
          %321 = sbr.rel (%p319) target = $region48
        $region47: #{coupling_apply.1} parent=43 // pred_region
          %p322 = scmp.lt.s32.totalorder %s18, 3
          %s323 = scalar_select %p322, %s18, 3
          %s324 = smul.addr %s323, 8
          %s325 = scalar_lea.vmem %s0, %s324
        $region48: #{coupling_apply.1} parent=43 // pred_fallthru
          _
        // Predicated region
        $region49: #{coupling_apply.1} parent=43 // pred_check
          %p326 = pneg %p64
        $region50: #{coupling_apply.1} parent=43 // pred_check_branch
          %328 = sbr.rel (%p326) target = $region52
        $region51: #{coupling_apply.1} parent=43 // pred_region
          %p329 = scmp.lt.s32.totalorder %s18, 3
          %s330 = scalar_select %p329, %s18, 3
          %s331 = smul.addr %s330, 8
          %s332 = scalar_lea.vmem %s1, %s331
        $region52: #{coupling_apply.1} parent=43 // pred_fallthru
          _
      $region44: #{coupling_apply.1} parent=5 // pred_fallthru
        _
      %p333 = scmp.le.s32.totalorder 1, %s18
      %p334 = scmp.lt.s32.totalorder %s18, 5
      %p335 = pnand %p333, %p334
      %p336 = pneg %p335
      // Predicated region
      $region53: #{coupling_apply.1} parent=5 // pred_check
        _
      $region54: #{coupling_apply.1} parent=5 // pred_check_branch
        %338 = sbr.rel (%p335) target = $region56
      $region55: #{coupling_apply.1} parent=5 // pred_region
        %s339 = ssub.s32 %s18, 1
        // Predicated region
        $region57: #{coupling_apply.1} parent=55 // pred_check
          %p340 = pneg %p154
        $region58: #{coupling_apply.1} parent=55 // pred_check_branch
          %342 = sbr.rel (%p340) target = $region60
        $region59: #{coupling_apply.1} parent=55 // pred_region
          %343 = dma.done [#allocation3], 1024
        $region60: #{coupling_apply.1} parent=55 // pred_fallthru
          _
        %p344 = scmp.lt.s32.totalorder %s23, 3
        %s345 = scalar_select %p344, %s23, 3
        %s346 = smul.addr %s345, 8
        %s347 = scalar_lea.vmem %s0, %s346
        %p348 = pneg %p44
        %p349 = pneg %p41
        %p350 = scmp.lt.s32.totalorder %s23, 3
        %s351 = scalar_select %p350, %s23, 3
        %s352 = smul.addr %s351, 8
        %s353 = scalar_lea.vmem %s1, %s352
        %p354 = pneg %p70
        %p355 = pneg %p67
        %p356 = pneg %p91
        %p357 = pneg %p88
        %p358 = pneg %p112
        %p359 = pneg %p109
        %p360 = pneg %p133
        %p361 = pneg %p130
        %p362 = pneg %p154
        %p363 = pneg %p151
        %p364 = pneg %p175
        %p365 = pneg %p172
        %p366 = pneg %p196
        %p367 = pneg %p193
        %p368 = pneg %p217
        %p369 = pneg %p214
        %p370 = pneg %p243
        %p371 = pneg %p240
        %p372 = scmp.lt.s32.totalorder %s23, 3
        %s373 = scalar_select %p372, %s23, 3
        %s374 = smul.addr %s373, 8
        %s375 = scalar_lea.vmem %s9, %s374
        %p376 = pneg %p269
        %p377 = pneg %p266
        %p378 = scmp.lt.s32.totalorder %s23, 3
        %s379 = scalar_select %p378, %s23, 3
        %s380 = smul.addr %s379, 8
        %s381 = scalar_lea.vmem %s10, %s380
        %p382 = scmp.lt.s32.totalorder %s23, 3
        %s383 = scalar_select %p382, %s23, 3
        %s384 = smul.addr %s383, 8
        %s385 = scalar_lea.vmem %s0, %s384
        %p386 = scmp.lt.s32.totalorder %s23, 3
        %s387 = scalar_select %p386, %s23, 3
        %s388 = smul.addr %s387, 8
        %s389 = scalar_lea.vmem %s1, %s388
        %p390 = scmp.lt.s32.totalorder %s23, 3
        %s391 = scalar_select %p390, %s23, 3
        %s392 = smul.addr %s391, 8
        %s393 = scalar_lea.vmem %s9, %s392
        %p394 = scmp.lt.s32.totalorder %s23, 3
        %s395 = scalar_select %p394, %s23, 3
        %s396 = smul.addr %s395, 8
        %s397 = scalar_lea.vmem %s10, %s396
        %v399 = vld [vmem:[%s385] sm:$0xff]
        %v400 = vld [vmem:[%s2] sm:$0x1]
        %v401 = vpack.c.bf16 %v399, %v399
        %v402 = vld [vmem:[%s3] sm:$0xf]
        %v403 = vld [vmem:[%s3 + $0x4] sm:$0xf]
        %v404 = vld [vmem:[%s3 + $0x8] sm:$0xf]
        %v405 = vld [vmem:[%s3 + $0xc] sm:$0xf]
        %v406 = vld [vmem:[%s3 + $0x10] sm:$0xf]
        %v407 = vld [vmem:[%s3 + $0x14] sm:$0xf]
        %v408 = vld [vmem:[%s3 + $0x18] sm:$0xf]
        %v409 = vld [vmem:[%s3 + $0x1c] sm:$0xf]
        %v410 = vld [vmem:[%s3 + $0x20] sm:$0xf]
        %v411 = vld [vmem:[%s3 + $0x24] sm:$0xf]
        %v412 = vld [vmem:[%s3 + $0x28] sm:$0xf]
        %v413 = vld [vmem:[%s3 + $0x2c] sm:$0xf]
        %v414 = vld [vmem:[%s3 + $0x30] sm:$0xf]
        %v415 = vld [vmem:[%s3 + $0x34] sm:$0xf]
        %v416 = vld [vmem:[%s3 + $0x38] sm:$0xf]
        %v417 = vld [vmem:[%s3 + $0x3c] sm:$0xf]
        %v418 = vld [vmem:[%s4] sm:$0x1]
        %v420 = vlaneseq
        %v421 = vshrl.u32 %v420, 7
        %v422 = vsub.s32 0, %v421
        %v423 = vrot.slane %v418, %v422
        %v441 = vunpack.c.l.b16 %v402
        %v442 = vunpack.c.l.b16 %v403
        %v443 = vunpack.c.l.b16 %v404
        %v444 = vunpack.c.l.b16 %v405
        %v445 = vunpack.c.l.b16 %v406
        %v446 = vunpack.c.l.b16 %v407
        %v447 = vunpack.c.l.b16 %v408
        %v448 = vunpack.c.l.b16 %v409
        %v449 = vunpack.c.l.b16 %v410
        %v450 = vunpack.c.l.b16 %v411
        %v451 = vunpack.c.l.b16 %v412
        %v452 = vunpack.c.l.b16 %v413
        %v453 = vunpack.c.l.b16 %v414
        %v454 = vunpack.c.l.b16 %v415
        %v455 = vunpack.c.l.b16 %v416
        %v456 = vunpack.c.l.b16 %v417
        %v457 = vpack.c.b16 %v442, %v441
        %v458 = vpack.c.b16 %v444, %v443
        %v459 = vpack.c.b16 %v446, %v445
        %v460 = vpack.c.b16 %v448, %v447
        %v461 = vpack.c.b16 %v450, %v449
        %v462 = vpack.c.b16 %v452, %v451
        %v463 = vpack.c.b16 %v454, %v453
        %v464 = vpack.c.b16 %v456, %v455
        %473 = vmatprep.subr.bf16.mxu0 0
        %474 = vmatpush1.bf16.msra.mxu0 %v457
        %475 = vmatprep.subr.bf16.mxu0 0
        %476 = vmatpush1.bf16.msra.mxu0 %v458
        %477 = vmatprep.subr.bf16.mxu0 0
        %478 = vmatpush1.bf16.msra.mxu0 %v459
        %479 = vmatprep.subr.bf16.mxu0 0
        %480 = vmatpush1.bf16.msra.mxu0 %v460
        %481 = vmatprep.subr.bf16.mxu0 0
        %482 = vmatpush1.bf16.msra.mxu0 %v461
        %483 = vmatprep.subr.bf16.mxu0 0
        %484 = vmatpush1.bf16.msra.mxu0 %v462
        %485 = vmatprep.subr.bf16.mxu0 0
        %486 = vmatpush1.bf16.msra.mxu0 %v463
        %487 = vmatprep.subr.bf16.mxu0 0
        %488 = vmatpush1.bf16.msra.mxu0 %v464
        %489 = vmatprep.subr.bf16.mxu0 0
        %490 = vmatpush1.bf16.msra.mxu0 0
        %491 = vmatprep.subr.bf16.mxu0 0
        %492 = vmatpush1.bf16.msra.mxu0 0
        %493 = vmatprep.subr.bf16.mxu0 0
        %494 = vmatpush1.bf16.msra.mxu0 0
        %495 = vmatprep.subr.bf16.mxu0 0
        %496 = vmatpush1.bf16.msra.mxu0 0
        %497 = vmatprep.subr.bf16.mxu0 0
        %498 = vmatpush1.bf16.msra.mxu0 0
        %499 = vmatprep.subr.bf16.mxu0 0
        %500 = vmatpush1.bf16.msra.mxu0 0
        %501 = vmatprep.subr.bf16.mxu0 0
        %502 = vmatpush1.bf16.msra.mxu0 0
        %503 = vmatprep.subr.bf16.mxu0 0
        %504 = vmatpush1.bf16.msra.mxu0 0
        %505 = vmatprep.mubr.bf16.mxu0 0
        %506 = vmatmul.mubr.bf16.gmra.mrb[0].mxu0 %v401
        %v507 = vpop.f32.mrb[0].mxu0
        %v508 = vadd.f32 %v423, %v507
        %v509 = vpop.f32.mrb[0].mxu0
        %v510 = vpop.f32.mrb[0].mxu0
        %v511 = vpop.f32.mrb[0].mxu0
        %512 = vdwg.mxu0
        %v513 = vmax.f32 %v508, 0.0
        %v514 = vpack.c.bf16 %v513, %v513
        %v515 = vld [vmem:[#allocation2] sm:$0xf]
        %v516 = vld [vmem:[#allocation2 + $0x4] sm:$0xf]
        %v517 = vld [vmem:[#allocation2 + $0x8] sm:$0xf]
        %v518 = vld [vmem:[#allocation2 + $0xc] sm:$0xf]
        %v519 = vld [vmem:[#allocation2 + $0x10] sm:$0xf]
        %v520 = vld [vmem:[#allocation2 + $0x14] sm:$0xf]
        %v521 = vld [vmem:[#allocation2 + $0x18] sm:$0xf]
        %v522 = vld [vmem:[#allocation2 + $0x1c] sm:$0xf]
        %v523 = vld [vmem:[#allocation2 + $0x20] sm:$0xf]
        %v524 = vld [vmem:[#allocation2 + $0x24] sm:$0xf]
        %v525 = vld [vmem:[#allocation2 + $0x28] sm:$0xf]
        %v526 = vld [vmem:[#allocation2 + $0x2c] sm:$0xf]
        %v527 = vld [vmem:[#allocation2 + $0x30] sm:$0xf]
        %v528 = vld [vmem:[#allocation2 + $0x34] sm:$0xf]
        %v529 = vld [vmem:[#allocation2 + $0x38] sm:$0xf]
        %v530 = vld [vmem:[#allocation2 + $0x3c] sm:$0xf]
        %v531 = vld [vmem:[%s6] sm:$0x1]
        %v533 = vlaneseq
        %v534 = vshrl.u32 %v533, 7
        %v535 = vsub.s32 0, %v534
        %v536 = vrot.slane %v531, %v535
        %v554 = vunpack.c.l.b16 %v515
        %v555 = vunpack.c.l.b16 %v516
        %v556 = vunpack.c.l.b16 %v517
        %v557 = vunpack.c.l.b16 %v518
        %v558 = vunpack.c.l.b16 %v519
        %v559 = vunpack.c.l.b16 %v520
        %v560 = vunpack.c.l.b16 %v521
        %v561 = vunpack.c.l.b16 %v522
        %v562 = vunpack.c.l.b16 %v523
        %v563 = vunpack.c.l.b16 %v524
        %v564 = vunpack.c.l.b16 %v525
        %v565 = vunpack.c.l.b16 %v526
        %v566 = vunpack.c.l.b16 %v527
        %v567 = vunpack.c.l.b16 %v528
        %v568 = vunpack.c.l.b16 %v529
        %v569 = vunpack.c.l.b16 %v530
        %v570 = vpack.c.b16 %v555, %v554
        %v571 = vpack.c.b16 %v557, %v556
        %v572 = vpack.c.b16 %v559, %v558
        %v573 = vpack.c.b16 %v561, %v560
        %v574 = vpack.c.b16 %v563, %v562
        %v575 = vpack.c.b16 %v565, %v564
        %v576 = vpack.c.b16 %v567, %v566
        %v577 = vpack.c.b16 %v569, %v568
        %586 = vmatprep.subr.bf16.mxu0 0
        %587 = vmatpush1.bf16.msra.mxu0 %v570
        %588 = vmatprep.subr.bf16.mxu0 0
        %589 = vmatpush1.bf16.msra.mxu0 %v571
        %590 = vmatprep.subr.bf16.mxu0 0
        %591 = vmatpush1.bf16.msra.mxu0 %v572
        %592 = vmatprep.subr.bf16.mxu0 0
        %593 = vmatpush1.bf16.msra.mxu0 %v573
        %594 = vmatprep.subr.bf16.mxu0 0
        %595 = vmatpush1.bf16.msra.mxu0 %v574
        %596 = vmatprep.subr.bf16.mxu0 0
        %597 = vmatpush1.bf16.msra.mxu0 %v575
        %598 = vmatprep.subr.bf16.mxu0 0
        %599 = vmatpush1.bf16.msra.mxu0 %v576
        %600 = vmatprep.subr.bf16.mxu0 0
        %601 = vmatpush1.bf16.msra.mxu0 %v577
        %602 = vmatprep.subr.bf16.mxu0 0
        %603 = vmatpush1.bf16.msra.mxu0 0
        %604 = vmatprep.subr.bf16.mxu0 0
        %605 = vmatpush1.bf16.msra.mxu0 0
        %606 = vmatprep.subr.bf16.mxu0 0
        %607 = vmatpush1.bf16.msra.mxu0 0
        %608 = vmatprep.subr.bf16.mxu0 0
        %609 = vmatpush1.bf16.msra.mxu0 0
        %610 = vmatprep.subr.bf16.mxu0 0
        %611 = vmatpush1.bf16.msra.mxu0 0
        %612 = vmatprep.subr.bf16.mxu0 0
        %613 = vmatpush1.bf16.msra.mxu0 0
        %614 = vmatprep.subr.bf16.mxu0 0
        %615 = vmatpush1.bf16.msra.mxu0 0
        %616 = vmatprep.subr.bf16.mxu0 0
        %617 = vmatpush1.bf16.msra.mxu0 0
        %618 = vmatprep.mubr.bf16.mxu0 0
        %619 = vmatmul.mubr.bf16.gmra.mrb[0].mxu0 %v514
        %v620 = vpop.f32.mrb[0].mxu0
        %v621 = vadd.f32 %v536, %v620
        %v622 = vpop.f32.mrb[0].mxu0
        %v623 = vpop.f32.mrb[0].mxu0
        %v624 = vpop.f32.mrb[0].mxu0
        %625 = vdwg.mxu0
        %v626 = vmax.f32 %v621, 0.0
        %v627 = vpack.c.bf16 %v626, %v626
        %v628 = vld [vmem:[%s7] sm:$0xff]
        %v629 = vld [vmem:[%s7 + $0x8] sm:$0xff]
        %v630 = vld [vmem:[%s7 + $0x10] sm:$0xff]
        %v631 = vld [vmem:[%s7 + $0x18] sm:$0xff]
        %v632 = vld [vmem:[%s7 + $0x20] sm:$0xff]
        %v633 = vld [vmem:[%s7 + $0x28] sm:$0xff]
        %v634 = vld [vmem:[%s7 + $0x30] sm:$0xff]
        %v635 = vld [vmem:[%s7 + $0x38] sm:$0xff]
        %v636 = vld [vmem:[%s7 + $0x40] sm:$0xff]
        %v637 = vld [vmem:[%s7 + $0x48] sm:$0xff]
        %v638 = vld [vmem:[%s7 + $0x50] sm:$0xff]
        %v639 = vld [vmem:[%s7 + $0x58] sm:$0xff]
        %v640 = vld [vmem:[%s7 + $0x60] sm:$0xff]
        %v641 = vld [vmem:[%s7 + $0x68] sm:$0xff]
        %v642 = vld [vmem:[%s7 + $0x70] sm:$0xff]
        %v643 = vld [vmem:[%s7 + $0x78] sm:$0xff]
        %v644 = vld [vmem:[%s8] sm:$0x3]
        %v646 = vlaneseq
        %v647 = vshrl.u32 %v646, 7
        %v648 = vsub.s32 0, %v647
        %v649 = vrot.slane %v644, %v648
        %v650 = vlaneseq
        %v651 = vshrl.u32 %v650, 7
        %v652 = vsub.s32 1, %v651
        %v653 = vrot.slane %v644, %v652
        %v672 = vunpack.c.l.b16 %v628
        %v673 = vunpack.c.h.b16 %v628
        %v674 = vunpack.c.l.b16 %v629
        %v675 = vunpack.c.h.b16 %v629
        %v676 = vunpack.c.l.b16 %v630
        %v677 = vunpack.c.h.b16 %v630
        %v678 = vunpack.c.l.b16 %v631
        %v679 = vunpack.c.h.b16 %v631
        %v680 = vunpack.c.l.b16 %v632
        %v681 = vunpack.c.h.b16 %v632
        %v682 = vunpack.c.l.b16 %v633
        %v683 = vunpack.c.h.b16 %v633
        %v684 = vunpack.c.l.b16 %v634
        %v685 = vunpack.c.h.b16 %v634
        %v686 = vunpack.c.l.b16 %v635
        %v687 = vunpack.c.h.b16 %v635
        %v688 = vunpack.c.l.b16 %v636
        %v689 = vunpack.c.h.b16 %v636
        %v690 = vunpack.c.l.b16 %v637
        %v691 = vunpack.c.h.b16 %v637
        %v692 = vunpack.c.l.b16 %v638
        %v693 = vunpack.c.h.b16 %v638
        %v694 = vunpack.c.l.b16 %v639
        %v695 = vunpack.c.h.b16 %v639
        %v696 = vunpack.c.l.b16 %v640
        %v697 = vunpack.c.h.b16 %v640
        %v698 = vunpack.c.l.b16 %v641
        %v699 = vunpack.c.h.b16 %v641
        %v700 = vunpack.c.l.b16 %v642
        %v701 = vunpack.c.h.b16 %v642
        %v702 = vunpack.c.l.b16 %v643
        %v703 = vunpack.c.h.b16 %v643
        %v704 = vpack.c.b16 %v674, %v672
        %v705 = vpack.c.b16 %v675, %v673
        %v706 = vpack.c.b16 %v678, %v676
        %v707 = vpack.c.b16 %v679, %v677
        %v708 = vpack.c.b16 %v682, %v680
        %v709 = vpack.c.b16 %v683, %v681
        %v710 = vpack.c.b16 %v686, %v684
        %v711 = vpack.c.b16 %v687, %v685
        %v712 = vpack.c.b16 %v690, %v688
        %v713 = vpack.c.b16 %v691, %v689
        %v714 = vpack.c.b16 %v694, %v692
        %v715 = vpack.c.b16 %v695, %v693
        %v716 = vpack.c.b16 %v698, %v696
        %v717 = vpack.c.b16 %v699, %v697
        %v718 = vpack.c.b16 %v702, %v700
        %v719 = vpack.c.b16 %v703, %v701
        %736 = vmatprep.subr.bf16.mxu0 %v705
        %737 = vmatpush1.bf16.msra.mxu0 %v704
        %738 = vmatprep.subr.bf16.mxu0 %v707
        %739 = vmatpush1.bf16.msra.mxu0 %v706
        %740 = vmatprep.subr.bf16.mxu0 %v709
        %741 = vmatpush1.bf16.msra.mxu0 %v708
        %742 = vmatprep.subr.bf16.mxu0 %v711
        %743 = vmatpush1.bf16.msra.mxu0 %v710
        %744 = vmatprep.subr.bf16.mxu0 %v713
        %745 = vmatpush1.bf16.msra.mxu0 %v712
        %746 = vmatprep.subr.bf16.mxu0 %v715
        %747 = vmatpush1.bf16.msra.mxu0 %v714
        %748 = vmatprep.subr.bf16.mxu0 %v717
        %749 = vmatpush1.bf16.msra.mxu0 %v716
        %750 = vmatprep.subr.bf16.mxu0 %v719
        %751 = vmatpush1.bf16.msra.mxu0 %v718
        %752 = vmatprep.subr.bf16.mxu0 0
        %753 = vmatpush1.bf16.msra.mxu0 0
        %754 = vmatprep.subr.bf16.mxu0 0
        %755 = vmatpush1.bf16.msra.mxu0 0
        %756 = vmatprep.subr.bf16.mxu0 0
        %757 = vmatpush1.bf16.msra.mxu0 0
        %758 = vmatprep.subr.bf16.mxu0 0
        %759 = vmatpush1.bf16.msra.mxu0 0
        %760 = vmatprep.subr.bf16.mxu0 0
        %761 = vmatpush1.bf16.msra.mxu0 0
        %762 = vmatprep.subr.bf16.mxu0 0
        %763 = vmatpush1.bf16.msra.mxu0 0
        %764 = vmatprep.subr.bf16.mxu0 0
        %765 = vmatpush1.bf16.msra.mxu0 0
        %766 = vmatprep.subr.bf16.mxu0 0
        %767 = vmatpush1.bf16.msra.mxu0 0
        %768 = vmatprep.mubr.bf16.mxu0 0
        %769 = vmatmul.mubr.bf16.gmra.mrb[0].mxu0 %v627
        %v770 = vpop.f32.mrb[0].mxu0
        %v771 = vadd.f32 %v649, %v770
        %v772 = vpop.f32.mrb[0].mxu0
        %v773 = vadd.f32 %v653, %v772
        %v774 = vpop.f32.mrb[0].mxu0
        %v775 = vpop.f32.mrb[0].mxu0
        %776 = vdwg.mxu0
        %v777 = vtanh.pop %v771
        %v778 = vsub.f32 1.0, %v400
        %v780 = vlaneseq
        %v781 = vshrl.u32 %v780, 7
        %v782 = vsub.s32 0, %v781
        %v783 = vrot.slane %v400, %v782
        %v785 = vmul.f32 %v783, %v399
        %v786 = vmul.f32 %v777, 1.442695
        %v787 = vpow.pop %v786
        %v788 = vmul.f32 %v399, %v787
        %v789 = vadd.f32 %v788, %v773
        %v791 = vlaneseq
        %v792 = vshrl.u32 %v791, 7
        %v793 = vsub.s32 0, %v792
        %v794 = vrot.slane %v778, %v793
        %v796 = vmul.f32 %v794, %v789
        %v797 = vadd.f32 %v785, %v796
        %798 = vst [vmem:[%s393] sm:$0xff] %v797
        %v799 = vld [vmem:[%s389] sm:$0xff]
        %v800 = vmul.f32 %v794, %v777
        %801 = vadd.xlane.f32.xlu0 %v800
        %v802 = vpop.xlane.xlu0 %801
        %v803 = vadd.f32 %v799, %v802
        %vm804 = vcmask 7168
        %805 = vst.msk [vmem:[%s397] sm:$0xff] %vm804, %v803
        %p806 = scmp.lt.s32.totalorder %s23, 3
        %s807 = scalar_select %p806, %s23, 3
        %s808 = smul.addr %s807, 8
        %s809 = scalar_lea.vmem %s9, %s808
        %p810 = scmp.lt.s32.totalorder %s23, 3
        %s811 = scalar_select %p810, %s23, 3
        %s812 = smul.addr %s811, 8
        %s813 = scalar_lea.vmem %s10, %s812
        // Predicated region
        $region61: #{coupling_apply.1} parent=55 // pred_check
          %p814 = pneg %p240
        $region62: #{coupling_apply.1} parent=55 // pred_check_branch
          %816 = sbr.rel (%p814) target = $region64
        $region63: #{coupling_apply.1} parent=55 // pred_region
          _
        $region64: #{coupling_apply.1} parent=55 // pred_fallthru
          _
        // Predicated region
        $region65: #{coupling_apply.1} parent=55 // pred_check
          %p817 = pneg %p266
        $region66: #{coupling_apply.1} parent=55 // pred_check_branch
          %819 = sbr.rel (%p817) target = $region68
        $region67: #{coupling_apply.1} parent=55 // pred_region
          _
        $region68: #{coupling_apply.1} parent=55 // pred_fallthru
          _
      $region56: #{coupling_apply.1} parent=5 // pred_fallthru
        _
      %p820 = scmp.le.s32.totalorder 2, %s18
      // Predicated region
      $region69: #{coupling_apply.1} parent=5 // pred_check
        %p821 = pneg %p820
      $region70: #{coupling_apply.1} parent=5 // pred_check_branch
        %823 = sbr.rel (%p821) target = $region72
      $region71: #{coupling_apply.1} parent=5 // pred_region
        %s824 = ssub.s32 %s18, 2
        // Predicated region
        $region73: #{coupling_apply.1} parent=71 // pred_check
          %p825 = pneg %p246
        $region74: #{coupling_apply.1} parent=71 // pred_check_branch
          %827 = sbr.rel (%p825) target = $region76
        $region75: #{coupling_apply.1} parent=71 // pred_region
          %p828 = scmp.lt.s32.totalorder %s24, 3
          %s829 = scalar_select %p828, %s24, 3
          %s830 = smul.addr %s829, 8
          %s831 = scalar_lea.vmem %s9, %s830
        $region76: #{coupling_apply.1} parent=71 // pred_fallthru
          _
        // Predicated region
        $region77: #{coupling_apply.1} parent=71 // pred_check
          %p832 = pneg %p272
        $region78: #{coupling_apply.1} parent=71 // pred_check_branch
          %834 = sbr.rel (%p832) target = $region80
        $region79: #{coupling_apply.1} parent=71 // pred_region
          %p835 = scmp.lt.s32.totalorder %s24, 3
          %s836 = scalar_select %p835, %s24, 3
          %s837 = smul.addr %s836, 8
          %s838 = scalar_lea.vmem %s10, %s837
        $region80: #{coupling_apply.1} parent=71 // pred_fallthru
          _
      $region72: #{coupling_apply.1} parent=5 // pred_fallthru
        _
    $region6: #{coupling_apply.1} parent=1 // loop_footer
      %s22 = sadd.s32 1, %s18
    $region7: #{coupling_apply.1} parent=1 // loop_footer_branch
      %17 = sbr.rel target = $region3
    $region8: #{coupling_apply.1} parent=1 // loop_exit
      _
    %839 = vsyncpa [#allocation3], 1
    %s840 = scalar_lea.sflag [#allocation3], 1
    %841 = vsyncpa %s840, 1

</llo_original>
